<compile_context>
chip_gen: v6e
topology: v6e:2x2x1
jax: 0.10.0
libtpu: 0.0.40
codegen_flags: <defaults>
</compile_context>

<pallas_src>
import functools

import jax
import jax.numpy as jnp
from jax import lax
from jax.experimental import pallas as pl
from jax.experimental.pallas import tpu as pltpu


def _coder_kernel(x_ref, we_ref, be_ref, wd_ref, bd_ref, o_ref,
                  *, layer_num, seg_len):
    # x_ref: (1, S, L) block for one batch element.
    x0 = x_ref[0]                        # (S, L) float32
    we = we_ref[...]                     # (L, E)
    wd = wd_ref[...]                     # (E, L)

    S = x0.shape[0]
    E = we.shape[1]
    L = wd.shape[1]

    # Hoist bias broadcasts out of the per-layer loop (no CSE of broadcast_in_dim).
    be_b = jnp.broadcast_to(be_ref[...], (S, E))   # (S, E)
    bd_b = jnp.broadcast_to(bd_ref[...], (S, L))   # (S, L)

    scale = 1.0 / jnp.sqrt(jnp.float32(seg_len))
    # Contract the last (lane) dim of both operands: (S,L) x (S,L) -> (S,S),
    # avoiding an explicit transpose/relayout of x.
    qk_dims = (((1,), (1,)), ((), ()))

    def layer_body(_, x):
        # encode: Linear(seg_len -> embed_dim); Dropout is identity at eval.
        x_new = jnp.dot(x, we, preferred_element_type=jnp.float32) + be_b   # (S, E)

        # attention: softmax((x x^T)/sqrt(L)) @ x_new
        scores = lax.dot_general(x, x, qk_dims,
                                 preferred_element_type=jnp.float32) * scale  # (S, S)
        m = jnp.max(scores, axis=-1, keepdims=True)
        p = jnp.exp(scores - m)
        denom = jnp.sum(p, axis=-1, keepdims=True)
        p = p * pl.reciprocal(denom, approx=True)
        attn_out = jnp.dot(p, x_new, preferred_element_type=jnp.float32)     # (S, E)

        # decode: Linear(embed_dim -> seg_len)
        dec = jnp.dot(attn_out, wd, preferred_element_type=jnp.float32) + bd_b  # (S, L)

        # ReLU + residual
        return jnp.maximum(dec, 0.0) + x

    # Whole layer stack fused; activation stays in vregs/VMEM across layers.
    out = lax.fori_loop(0, layer_num, layer_body, x0, unroll=True)
    o_ref[0] = out


def coder_forward(x, params, layer_num):
    """Full Coder forward (all layers fused). x: (B, S, L) float32."""
    # copy.deepcopy(layer) in the reference module => every layer has identical
    # parameters; one shared set is reused for all `layer_num` layers.
    w_enc, b_enc, w_dec, b_dec = params
    B, S, L = x.shape
    E = w_enc.shape[1]
    kernel = functools.partial(_coder_kernel, layer_num=layer_num, seg_len=L)
    return pl.pallas_call(
        kernel,
        out_shape=jax.ShapeDtypeStruct((B, S, L), jnp.float32),
        grid_spec=pltpu.PrefetchScalarGridSpec(
            num_scalar_prefetch=0,
            grid=(B,),                                          # 2-way parallel (v7x TCs)
            in_specs=[
                pl.BlockSpec((1, S, L), lambda b: (b, 0, 0)),   # x (per-batch)
                pl.BlockSpec((L, E), lambda b: (0, 0)),          # w_enc (resident)
                pl.BlockSpec((1, E), lambda b: (0, 0)),          # b_enc
                pl.BlockSpec((E, L), lambda b: (0, 0)),          # w_dec
                pl.BlockSpec((1, L), lambda b: (0, 0)),          # b_dec
            ],
            out_specs=pl.BlockSpec((1, S, L), lambda b: (b, 0, 0)),
        ),
        compiler_params=pltpu.CompilerParams(
            dimension_semantics=("parallel",)),
    )(x, w_enc, b_enc, w_dec, b_dec)


def init_params(key, seg_len):
    embed_dim = min(seg_len // 2, 48)
    k1, k2, k3, k4 = jax.random.split(key, 4)
    s_enc = 1.0 / jnp.sqrt(jnp.float32(seg_len))
    s_dec = 1.0 / jnp.sqrt(jnp.float32(embed_dim))
    w_enc = jax.random.uniform(k1, (seg_len, embed_dim), jnp.float32, -s_enc, s_enc)
    b_enc = jax.random.uniform(k2, (1, embed_dim), jnp.float32, -s_enc, s_enc)
    w_dec = jax.random.uniform(k3, (embed_dim, seg_len), jnp.float32, -s_dec, s_dec)
    b_dec = jax.random.uniform(k4, (1, seg_len), jnp.float32, -s_dec, s_dec)
    return w_enc, b_enc, w_dec, b_dec


if __name__ == "__main__":
    # Small shapes implied by the forward: (batch, seq, seg_len)
    batch, seq, seg_len = 2, 8, 16
    layer_num = 3

    key = jax.random.PRNGKey(0)
    kx, kp = jax.random.split(key)
    x = jax.random.normal(kx, (batch, seq, seg_len), jnp.float32)
    params = init_params(kp, seg_len)

    out = coder_forward(x, params, layer_num)
    out = jax.block_until_ready(out)

    assert out.shape == (batch, seq, seg_len)
    assert out.dtype == jnp.float32
    assert bool(jnp.all(jnp.isfinite(out)))
    print("KERNEL_OK")
</pallas_src>

<mosaic_0001>
module attributes {stable_mosaic.version = 11 : i64} {
  func.func @_coder_kernel(%arg0: i32, %arg1: memref<1x8x16xf32, #tpu.memory_space<vmem>>, %arg2: memref<16x8xf32, #tpu.memory_space<vmem>>, %arg3: memref<1x8xf32, #tpu.memory_space<vmem>>, %arg4: memref<8x16xf32, #tpu.memory_space<vmem>>, %arg5: memref<1x16xf32, #tpu.memory_space<vmem>>, %arg6: memref<1x8x16xf32, #tpu.memory_space<vmem>>) attributes {dimension_semantics = [#tpu.dimension_semantics<parallel>], iteration_bounds = array<i64: 2>, scalar_prefetch = 0 : i64, scratch_operands = 0 : i64, tpu.core_type = #tpu.core_type<tc>, window_params = [{transform_indices = @transform_0, window_bounds = array<i64: 1, 8, 16>}, {pipeline_mode = #tpu.pipeline_mode<synchronous>, transform_indices = @transform_1, window_bounds = array<i64: 16, 8>}, {pipeline_mode = #tpu.pipeline_mode<synchronous>, transform_indices = @transform_2, window_bounds = array<i64: 1, 8>}, {pipeline_mode = #tpu.pipeline_mode<synchronous>, transform_indices = @transform_3, window_bounds = array<i64: 8, 16>}, {pipeline_mode = #tpu.pipeline_mode<synchronous>, transform_indices = @transform_4, window_bounds = array<i64: 1, 16>}, {transform_indices = @transform_5, window_bounds = array<i64: 1, 8, 16>}]} {
    %c0 = arith.constant 0 : index
    %c0_0 = arith.constant 0 : index
    %c0_1 = arith.constant 0 : index
    %0 = vector.load %arg1[%c0, %c0_0, %c0_1] : memref<1x8x16xf32, #tpu.memory_space<vmem>>, vector<1x8x16xf32>
    %1 = vector.shape_cast %0 : vector<1x8x16xf32> to vector<8x16xf32>
    %c0_2 = arith.constant 0 : index
    %c0_3 = arith.constant 0 : index
    %2 = vector.load %arg2[%c0_2, %c0_3] : memref<16x8xf32, #tpu.memory_space<vmem>>, vector<16x8xf32>
    %c0_4 = arith.constant 0 : index
    %c0_5 = arith.constant 0 : index
    %3 = vector.load %arg4[%c0_4, %c0_5] : memref<8x16xf32, #tpu.memory_space<vmem>>, vector<8x16xf32>
    %c0_6 = arith.constant 0 : index
    %c0_7 = arith.constant 0 : index
    %4 = vector.load %arg3[%c0_6, %c0_7] : memref<1x8xf32, #tpu.memory_space<vmem>>, vector<1x8xf32>
    %5 = vector.shape_cast %4 : vector<1x8xf32> to vector<1x8xf32>
    %6 = vector.broadcast %5 : vector<1x8xf32> to vector<8x8xf32>
    %c0_8 = arith.constant 0 : index
    %c0_9 = arith.constant 0 : index
    %7 = vector.load %arg5[%c0_8, %c0_9] : memref<1x16xf32, #tpu.memory_space<vmem>>, vector<1x16xf32>
    %8 = vector.shape_cast %7 : vector<1x16xf32> to vector<1x16xf32>
    %9 = vector.broadcast %8 : vector<1x16xf32> to vector<8x16xf32>
    %cst = arith.constant 1.600000e+01 : f32
    %10 = math.sqrt %cst : f32
    %cst_10 = arith.constant 1.000000e+00 : f32
    %11 = arith.divf %cst_10, %10 : f32
    %c0_i32 = arith.constant 0 : i32
    %cst_11 = arith.constant dense<0.000000e+00> : vector<8x8xf32>
    %12 = tpu.matmul %1, %2, %cst_11 {dimension_numbers = #tpu.dot_dimension_numbers<[1], [0], [0], [1], [0, 0, 1, 1], [], []>} : vector<8x16xf32>, vector<16x8xf32>, vector<8x8xf32> -> vector<8x8xf32>
    %13 = arith.addf %12, %6 : vector<8x8xf32>
    %cst_12 = arith.constant dense<0.000000e+00> : vector<8x8xf32>
    %14 = tpu.matmul %1, %1, %cst_12 {dimension_numbers = #tpu.dot_dimension_numbers<[1], [1], [0], [0], [0, 0, 1, 0], [], []>} : vector<8x16xf32>, vector<8x16xf32>, vector<8x8xf32> -> vector<8x8xf32>
    %15 = vector.broadcast %11 : f32 to vector<8x8xf32>
    %16 = arith.mulf %14, %15 : vector<8x8xf32>
    %cst_13 = arith.constant dense<0xFF800000> : vector<8xf32>
    %17 = vector.multi_reduction <maximumf>, %16, %cst_13 [1] : vector<8x8xf32> to vector<8xf32>
    %18 = vector.shape_cast %17 : vector<8xf32> to vector<8x1xf32>
    %19 = vector.broadcast %18 : vector<8x1xf32> to vector<8x8xf32>
    %20 = arith.subf %16, %19 : vector<8x8xf32>
    %21 = math.exp %20 : vector<8x8xf32>
    %cst_14 = arith.constant dense<0.000000e+00> : vector<8xf32>
    %22 = vector.multi_reduction <add>, %21, %cst_14 [1] : vector<8x8xf32> to vector<8xf32>
    %23 = vector.shape_cast %22 : vector<8xf32> to vector<8x1xf32>
    %24 = tpu.reciprocal %23 {approx = true} : vector<8x1xf32> -> vector<8x1xf32>
    %25 = vector.broadcast %24 : vector<8x1xf32> to vector<8x8xf32>
    %26 = arith.mulf %21, %25 : vector<8x8xf32>
    %cst_15 = arith.constant dense<0.000000e+00> : vector<8x8xf32>
    %27 = tpu.matmul %26, %13, %cst_15 {dimension_numbers = #tpu.dot_dimension_numbers<[1], [0], [0], [1], [0, 0, 1, 1], [], []>} : vector<8x8xf32>, vector<8x8xf32>, vector<8x8xf32> -> vector<8x8xf32>
    %cst_16 = arith.constant dense<0.000000e+00> : vector<8x16xf32>
    %28 = tpu.matmul %27, %3, %cst_16 {dimension_numbers = #tpu.dot_dimension_numbers<[1], [0], [0], [1], [0, 0, 1, 1], [], []>} : vector<8x8xf32>, vector<8x16xf32>, vector<8x16xf32> -> vector<8x16xf32>
    %29 = arith.addf %28, %9 : vector<8x16xf32>
    %cst_17 = arith.constant 0.000000e+00 : f32
    %30 = vector.broadcast %cst_17 : f32 to vector<8x16xf32>
    %31 = arith.maximumf %29, %30 : vector<8x16xf32>
    %32 = arith.addf %31, %1 : vector<8x16xf32>
    %c1_i32 = arith.constant 1 : i32
    %cst_18 = arith.constant dense<0.000000e+00> : vector<8x8xf32>
    %33 = tpu.matmul %32, %2, %cst_18 {dimension_numbers = #tpu.dot_dimension_numbers<[1], [0], [0], [1], [0, 0, 1, 1], [], []>} : vector<8x16xf32>, vector<16x8xf32>, vector<8x8xf32> -> vector<8x8xf32>
    %34 = arith.addf %33, %6 : vector<8x8xf32>
    %cst_19 = arith.constant dense<0.000000e+00> : vector<8x8xf32>
    %35 = tpu.matmul %32, %32, %cst_19 {dimension_numbers = #tpu.dot_dimension_numbers<[1], [1], [0], [0], [0, 0, 1, 0], [], []>} : vector<8x16xf32>, vector<8x16xf32>, vector<8x8xf32> -> vector<8x8xf32>
    %36 = vector.broadcast %11 : f32 to vector<8x8xf32>
    %37 = arith.mulf %35, %36 : vector<8x8xf32>
    %cst_20 = arith.constant dense<0xFF800000> : vector<8xf32>
    %38 = vector.multi_reduction <maximumf>, %37, %cst_20 [1] : vector<8x8xf32> to vector<8xf32>
    %39 = vector.shape_cast %38 : vector<8xf32> to vector<8x1xf32>
    %40 = vector.broadcast %39 : vector<8x1xf32> to vector<8x8xf32>
    %41 = arith.subf %37, %40 : vector<8x8xf32>
    %42 = math.exp %41 : vector<8x8xf32>
    %cst_21 = arith.constant dense<0.000000e+00> : vector<8xf32>
    %43 = vector.multi_reduction <add>, %42, %cst_21 [1] : vector<8x8xf32> to vector<8xf32>
    %44 = vector.shape_cast %43 : vector<8xf32> to vector<8x1xf32>
    %45 = tpu.reciprocal %44 {approx = true} : vector<8x1xf32> -> vector<8x1xf32>
    %46 = vector.broadcast %45 : vector<8x1xf32> to vector<8x8xf32>
    %47 = arith.mulf %42, %46 : vector<8x8xf32>
    %cst_22 = arith.constant dense<0.000000e+00> : vector<8x8xf32>
    %48 = tpu.matmul %47, %34, %cst_22 {dimension_numbers = #tpu.dot_dimension_numbers<[1], [0], [0], [1], [0, 0, 1, 1], [], []>} : vector<8x8xf32>, vector<8x8xf32>, vector<8x8xf32> -> vector<8x8xf32>
    %cst_23 = arith.constant dense<0.000000e+00> : vector<8x16xf32>
    %49 = tpu.matmul %48, %3, %cst_23 {dimension_numbers = #tpu.dot_dimension_numbers<[1], [0], [0], [1], [0, 0, 1, 1], [], []>} : vector<8x8xf32>, vector<8x16xf32>, vector<8x16xf32> -> vector<8x16xf32>
    %50 = arith.addf %49, %9 : vector<8x16xf32>
    %cst_24 = arith.constant 0.000000e+00 : f32
    %51 = vector.broadcast %cst_24 : f32 to vector<8x16xf32>
    %52 = arith.maximumf %50, %51 : vector<8x16xf32>
    %53 = arith.addf %52, %32 : vector<8x16xf32>
    %c2_i32 = arith.constant 2 : i32
    %cst_25 = arith.constant dense<0.000000e+00> : vector<8x8xf32>
    %54 = tpu.matmul %53, %2, %cst_25 {dimension_numbers = #tpu.dot_dimension_numbers<[1], [0], [0], [1], [0, 0, 1, 1], [], []>} : vector<8x16xf32>, vector<16x8xf32>, vector<8x8xf32> -> vector<8x8xf32>
    %55 = arith.addf %54, %6 : vector<8x8xf32>
    %cst_26 = arith.constant dense<0.000000e+00> : vector<8x8xf32>
    %56 = tpu.matmul %53, %53, %cst_26 {dimension_numbers = #tpu.dot_dimension_numbers<[1], [1], [0], [0], [0, 0, 1, 0], [], []>} : vector<8x16xf32>, vector<8x16xf32>, vector<8x8xf32> -> vector<8x8xf32>
    %57 = vector.broadcast %11 : f32 to vector<8x8xf32>
    %58 = arith.mulf %56, %57 : vector<8x8xf32>
    %cst_27 = arith.constant dense<0xFF800000> : vector<8xf32>
    %59 = vector.multi_reduction <maximumf>, %58, %cst_27 [1] : vector<8x8xf32> to vector<8xf32>
    %60 = vector.shape_cast %59 : vector<8xf32> to vector<8x1xf32>
    %61 = vector.broadcast %60 : vector<8x1xf32> to vector<8x8xf32>
    %62 = arith.subf %58, %61 : vector<8x8xf32>
    %63 = math.exp %62 : vector<8x8xf32>
    %cst_28 = arith.constant dense<0.000000e+00> : vector<8xf32>
    %64 = vector.multi_reduction <add>, %63, %cst_28 [1] : vector<8x8xf32> to vector<8xf32>
    %65 = vector.shape_cast %64 : vector<8xf32> to vector<8x1xf32>
    %66 = tpu.reciprocal %65 {approx = true} : vector<8x1xf32> -> vector<8x1xf32>
    %67 = vector.broadcast %66 : vector<8x1xf32> to vector<8x8xf32>
    %68 = arith.mulf %63, %67 : vector<8x8xf32>
    %cst_29 = arith.constant dense<0.000000e+00> : vector<8x8xf32>
    %69 = tpu.matmul %68, %55, %cst_29 {dimension_numbers = #tpu.dot_dimension_numbers<[1], [0], [0], [1], [0, 0, 1, 1], [], []>} : vector<8x8xf32>, vector<8x8xf32>, vector<8x8xf32> -> vector<8x8xf32>
    %cst_30 = arith.constant dense<0.000000e+00> : vector<8x16xf32>
    %70 = tpu.matmul %69, %3, %cst_30 {dimension_numbers = #tpu.dot_dimension_numbers<[1], [0], [0], [1], [0, 0, 1, 1], [], []>} : vector<8x8xf32>, vector<8x16xf32>, vector<8x16xf32> -> vector<8x16xf32>
    %71 = arith.addf %70, %9 : vector<8x16xf32>
    %cst_31 = arith.constant 0.000000e+00 : f32
    %72 = vector.broadcast %cst_31 : f32 to vector<8x16xf32>
    %73 = arith.maximumf %71, %72 : vector<8x16xf32>
    %74 = arith.addf %73, %53 : vector<8x16xf32>
    %c0_32 = arith.constant 0 : index
    %c0_33 = arith.constant 0 : index
    %c0_34 = arith.constant 0 : index
    %75 = vector.load %arg6[%c0_32, %c0_33, %c0_34] : memref<1x8x16xf32, #tpu.memory_space<vmem>>, vector<1x8x16xf32>
    %76 = vector.shape_cast %75 : vector<1x8x16xf32> to vector<8x16xf32>
    %77 = vector.shape_cast %74 : vector<8x16xf32> to vector<1x8x16xf32>
    tpu.vector_store %arg6[%c0_32, %c0_33, %c0_34], %77 {strides = array<i32>} : memref<1x8x16xf32, #tpu.memory_space<vmem>>, vector<1x8x16xf32>,
    return
  }
  func.func @transform_0(%arg0: i32) -> (i32, i32, i32) {
    %c0_i32 = arith.constant 0 : i32
    %c0_i32_0 = arith.constant 0 : i32
    %c0_i32_1 = arith.constant 0 : i32
    return %arg0, %c0_i32, %c0_i32_0 : i32, i32, i32
  }
  func.func @transform_1(%arg0: i32) -> (i32, i32) {
    %c0_i32 = arith.constant 0 : i32
    %c0_i32_0 = arith.constant 0 : i32
    %c0_i32_1 = arith.constant 0 : i32
    return %c0_i32, %c0_i32_0 : i32, i32
  }
  func.func @transform_2(%arg0: i32) -> (i32, i32) {
    %c0_i32 = arith.constant 0 : i32
    %c0_i32_0 = arith.constant 0 : i32
    %c0_i32_1 = arith.constant 0 : i32
    return %c0_i32, %c0_i32_0 : i32, i32
  }
  func.func @transform_3(%arg0: i32) -> (i32, i32) {
    %c0_i32 = arith.constant 0 : i32
    %c0_i32_0 = arith.constant 0 : i32
    %c0_i32_1 = arith.constant 0 : i32
    return %c0_i32, %c0_i32_0 : i32, i32
  }
  func.func @transform_4(%arg0: i32) -> (i32, i32) {
    %c0_i32 = arith.constant 0 : i32
    %c0_i32_0 = arith.constant 0 : i32
    %c0_i32_1 = arith.constant 0 : i32
    return %c0_i32, %c0_i32_0 : i32, i32
  }
  func.func @transform_5(%arg0: i32) -> (i32, i32, i32) {
    %c0_i32 = arith.constant 0 : i32
    %c0_i32_0 = arith.constant 0 : i32
    %c0_i32_1 = arith.constant 0 : i32
    return %arg0, %c0_i32, %c0_i32_0 : i32, i32, i32
  }
}

</mosaic_0001>

<llo_original>
// kernel: tpu_custom_call.1
$region0: #{tpu_custom_call.1}
  #allocation0 [shape = 'u32[]', space=smem, size = 0x4, offset = 0x4, fixed_abs, tag = 'smem constant byte address 0x4 - core index']
  #allocation1 [shape = 'u32[144,128]{1,0:T(1,128)}', space=vmem, size = 0x12000, scoped, tag = 'internal scratch']
  %s0 = inlined_call_operand.vmem [shape: f32[2,8,16], index: 0, kind: input, shape index: {}]
  %s1 = inlined_call_operand.vmem [shape: f32[16,8], index: 1, kind: input, shape index: {}]
  %s2 = inlined_call_operand.vmem [shape: f32[1,8], index: 2, kind: input, shape index: {}]
  %s3 = inlined_call_operand.vmem [shape: f32[8,16], index: 3, kind: input, shape index: {}]
  %s4 = inlined_call_operand.vmem [shape: f32[1,16], index: 4, kind: input, shape index: {}]
  %s5 = inlined_call_operand.hbm [shape: f32[2,8,16], index: 5, kind: output, shape index: {}]
  %s6 = sld [smem:[#allocation0]]
  $region53: #{tpu_custom_call.1} parent=0
    _
  %s8 = ssub.s32 1, %s6
  %s9 = scalar_select 0, %s8, %s6
  $region1: #{tpu_custom_call.1} parent=0
    #allocation2 [shape = 'u8[8192]{0}', space=vmem, size = 0x2000, scoped, tag = 'output window, operand 0']
    #allocation3 [shape = 's32[2]{0}', space=sflag, size = 0x8, scoped, tag = 'scoped memory for tpu_custom_call.1']
    %10 = vsyncpa [#allocation3], 0
    %s11 = scalar_lea.sflag [#allocation3], 1
    %12 = vsyncpa %s11, 0
    loop: start=0, step=1, limit=4
    $region2: #{tpu_custom_call.1} parent=1 // loop_pre_header
      _
    $region3: #{tpu_custom_call.1} parent=1 // loop_header
      %s14 = sphi 0, %s18
      %p15 = scmp.ge.s32.totalorder %s14, 4
      %s24 = sphi 0, %s26
      %s27 = sphi 0, %s24
      %s28 = sphi 0, %s27
      %s44 = sphi 0, %s28
      %s48 = sphi 0, %s48
      %s50 = sphi 0, %s48
      %s51 = sphi 0, %s50
      %s65 = sphi 0, %s51
      %s69 = sphi 0, %s69
      %s71 = sphi 0, %s69
      %s72 = sphi 0, %s71
      %s86 = sphi 0, %s72
      %s90 = sphi 0, %s90
      %s92 = sphi 0, %s90
      %s93 = sphi 0, %s92
      %s107 = sphi 0, %s93
      %s111 = sphi 0, %s111
      %s113 = sphi 0, %s111
      %s114 = sphi 0, %s113
      %s128 = sphi 0, %s114
      %s134 = sphi 0, %s136
      %s137 = sphi 0, %s134
      %s138 = sphi 0, %s137
      %s154 = sphi 0, %s138
    $region4: #{tpu_custom_call.1} parent=1 // loop_header_branch
      %17 = sbr.rel (%p15) target = $region8
    $region5: #{tpu_custom_call.1} parent=1 // loop_body
      %s19 = ssub.s32 %s14, 1
      %s20 = ssub.s32 %s14, 2
      %s21 = sadd.s32 %s14, 1
      %s22 = ssub.s32 %s14, %s21
      %p23 = scmp.eq.s32.totalorder %s22, 0
      %s25 = sadd.s32 %s24, 1
      %s26 = scalar_select %p23, %s24, %s25
      %p29 = pneg %p23
      %p30 = scmp.eq.s32.totalorder %s14, 1
      %p31 = por %p29, %p30
      %p32 = scmp.ne.s32.totalorder %s24, %s27
      %p33 = scmp.eq.s32.totalorder %s14, 0
      %p34 = por %p32, %p33
      %p35 = scmp.ne.s32.totalorder %s24, %s27
      %p36 = scmp.eq.s32.totalorder %s19, 1
      %p37 = por %p35, %p36
      %p38 = scmp.ne.s32.totalorder %s27, %s28
      %p39 = scmp.eq.s32.totalorder %s19, 0
      %p40 = por %p38, %p39
      %p41 = scmp.ne.s32.totalorder %s27, %s28
      %p42 = scmp.eq.s32.totalorder %s20, 1
      %p43 = por %p41, %p42
      %p45 = scmp.ne.s32.totalorder %s28, %s44
      %p46 = scmp.eq.s32.totalorder %s20, 0
      %p47 = por %p45, %p46
      %s49 = sadd.s32 %s48, 1
      %p52 = scmp.eq.s32.totalorder %s14, 1
      %p53 = scmp.ne.s32.totalorder %s48, %s50
      %p54 = scmp.eq.s32.totalorder %s14, 0
      %p55 = por %p53, %p54
      %p56 = scmp.ne.s32.totalorder %s48, %s50
      %p57 = scmp.eq.s32.totalorder %s19, 1
      %p58 = por %p56, %p57
      %p59 = scmp.ne.s32.totalorder %s50, %s51
      %p60 = scmp.eq.s32.totalorder %s19, 0
      %p61 = por %p59, %p60
      %p62 = scmp.ne.s32.totalorder %s50, %s51
      %p63 = scmp.eq.s32.totalorder %s20, 1
      %p64 = por %p62, %p63
      %p66 = scmp.ne.s32.totalorder %s51, %s65
      %p67 = scmp.eq.s32.totalorder %s20, 0
      %p68 = por %p66, %p67
      %s70 = sadd.s32 %s69, 1
      %p73 = scmp.eq.s32.totalorder %s14, 1
      %p74 = scmp.ne.s32.totalorder %s69, %s71
      %p75 = scmp.eq.s32.totalorder %s14, 0
      %p76 = por %p74, %p75
      %p77 = scmp.ne.s32.totalorder %s69, %s71
      %p78 = scmp.eq.s32.totalorder %s19, 1
      %p79 = por %p77, %p78
      %p80 = scmp.ne.s32.totalorder %s71, %s72
      %p81 = scmp.eq.s32.totalorder %s19, 0
      %p82 = por %p80, %p81
      %p83 = scmp.ne.s32.totalorder %s71, %s72
      %p84 = scmp.eq.s32.totalorder %s20, 1
      %p85 = por %p83, %p84
      %p87 = scmp.ne.s32.totalorder %s72, %s86
      %p88 = scmp.eq.s32.totalorder %s20, 0
      %p89 = por %p87, %p88
      %s91 = sadd.s32 %s90, 1
      %p94 = scmp.eq.s32.totalorder %s14, 1
      %p95 = scmp.ne.s32.totalorder %s90, %s92
      %p96 = scmp.eq.s32.totalorder %s14, 0
      %p97 = por %p95, %p96
      %p98 = scmp.ne.s32.totalorder %s90, %s92
      %p99 = scmp.eq.s32.totalorder %s19, 1
      %p100 = por %p98, %p99
      %p101 = scmp.ne.s32.totalorder %s92, %s93
      %p102 = scmp.eq.s32.totalorder %s19, 0
      %p103 = por %p101, %p102
      %p104 = scmp.ne.s32.totalorder %s92, %s93
      %p105 = scmp.eq.s32.totalorder %s20, 1
      %p106 = por %p104, %p105
      %p108 = scmp.ne.s32.totalorder %s93, %s107
      %p109 = scmp.eq.s32.totalorder %s20, 0
      %p110 = por %p108, %p109
      %s112 = sadd.s32 %s111, 1
      %p115 = scmp.eq.s32.totalorder %s14, 1
      %p116 = scmp.ne.s32.totalorder %s111, %s113
      %p117 = scmp.eq.s32.totalorder %s14, 0
      %p118 = por %p116, %p117
      %p119 = scmp.ne.s32.totalorder %s111, %s113
      %p120 = scmp.eq.s32.totalorder %s19, 1
      %p121 = por %p119, %p120
      %p122 = scmp.ne.s32.totalorder %s113, %s114
      %p123 = scmp.eq.s32.totalorder %s19, 0
      %p124 = por %p122, %p123
      %p125 = scmp.ne.s32.totalorder %s113, %s114
      %p126 = scmp.eq.s32.totalorder %s20, 1
      %p127 = por %p125, %p126
      %p129 = scmp.ne.s32.totalorder %s114, %s128
      %p130 = scmp.eq.s32.totalorder %s20, 0
      %p131 = por %p129, %p130
      %s132 = ssub.s32 %s14, %s21
      %p133 = scmp.eq.s32.totalorder %s132, 0
      %s135 = sadd.s32 %s134, 1
      %s136 = scalar_select %p133, %s134, %s135
      %p139 = pneg %p133
      %p140 = scmp.eq.s32.totalorder %s14, 1
      %p141 = por %p139, %p140
      %p142 = scmp.ne.s32.totalorder %s134, %s137
      %p143 = scmp.eq.s32.totalorder %s14, 0
      %p144 = por %p142, %p143
      %p145 = scmp.ne.s32.totalorder %s134, %s137
      %p146 = scmp.eq.s32.totalorder %s19, 1
      %p147 = por %p145, %p146
      %p148 = scmp.ne.s32.totalorder %s137, %s138
      %p149 = scmp.eq.s32.totalorder %s19, 0
      %p150 = por %p148, %p149
      %p151 = scmp.ne.s32.totalorder %s137, %s138
      %p152 = scmp.eq.s32.totalorder %s20, 1
      %p153 = por %p151, %p152
      %p155 = scmp.ne.s32.totalorder %s138, %s154
      %p156 = scmp.eq.s32.totalorder %s20, 0
      %p157 = por %p155, %p156
      %p158 = scmp.le.s32.totalorder 1, %s14
      %p159 = scmp.lt.s32.totalorder %s14, 3
      %p160 = pnand %p158, %p159
      %p161 = pneg %p160
      // Predicated region
      $region9: #{tpu_custom_call.1} parent=5 // pred_check
        _
      $region10: #{tpu_custom_call.1} parent=5 // pred_check_branch
        %163 = sbr.rel (%p160) target = $region12
      $region11: #{tpu_custom_call.1} parent=5 // pred_region
        %s164 = ssub.s32 %s14, 1
        // Predicated region
        $region13: #{tpu_custom_call.1} parent=11 // pred_check
          %p165 = pneg %p61
        $region14: #{tpu_custom_call.1} parent=11 // pred_check_branch
          %167 = sbr.rel (%p165) target = $region16
        $region15: #{tpu_custom_call.1} parent=11 // pred_region
          _
        $region16: #{tpu_custom_call.1} parent=11 // pred_fallthru
          _
        // Predicated region
        $region17: #{tpu_custom_call.1} parent=11 // pred_check
          %p168 = pneg %p82
        $region18: #{tpu_custom_call.1} parent=11 // pred_check_branch
          %170 = sbr.rel (%p168) target = $region20
        $region19: #{tpu_custom_call.1} parent=11 // pred_region
          _
        $region20: #{tpu_custom_call.1} parent=11 // pred_fallthru
          _
        // Predicated region
        $region21: #{tpu_custom_call.1} parent=11 // pred_check
          %p171 = pneg %p103
        $region22: #{tpu_custom_call.1} parent=11 // pred_check_branch
          %173 = sbr.rel (%p171) target = $region24
        $region23: #{tpu_custom_call.1} parent=11 // pred_region
          _
        $region24: #{tpu_custom_call.1} parent=11 // pred_fallthru
          _
        // Predicated region
        $region25: #{tpu_custom_call.1} parent=11 // pred_check
          %p174 = pneg %p124
        $region26: #{tpu_custom_call.1} parent=11 // pred_check_branch
          %176 = sbr.rel (%p174) target = $region28
        $region27: #{tpu_custom_call.1} parent=11 // pred_region
          _
        $region28: #{tpu_custom_call.1} parent=11 // pred_fallthru
          _
      $region12: #{tpu_custom_call.1} parent=5 // pred_fallthru
        _
      %p177 = scmp.lt.s32.totalorder %s14, 2
      // Predicated region
      $region29: #{tpu_custom_call.1} parent=5 // pred_check
        %p178 = pneg %p177
      $region30: #{tpu_custom_call.1} parent=5 // pred_check_branch
        %180 = sbr.rel (%p178) target = $region32
      $region31: #{tpu_custom_call.1} parent=5 // pred_region
        // Predicated region
        $region33: #{tpu_custom_call.1} parent=31 // pred_check
          %p181 = pneg %p34
        $region34: #{tpu_custom_call.1} parent=31 // pred_check_branch
          %183 = sbr.rel (%p181) target = $region36
        $region35: #{tpu_custom_call.1} parent=31 // pred_region
          %p184 = scmp.lt.s32.totalorder %s14, 1
          %s185 = scalar_select %p184, %s14, 1
          %s186 = smul.addr %s185, 8
          %s187 = scalar_lea.vmem %s0, %s186
        $region36: #{tpu_custom_call.1} parent=31 // pred_fallthru
          _
      $region32: #{tpu_custom_call.1} parent=5 // pred_fallthru
        _
      %p188 = scmp.le.s32.totalorder 1, %s14
      %p189 = scmp.lt.s32.totalorder %s14, 3
      %p190 = pnand %p188, %p189
      %p191 = pneg %p190
      // Predicated region
      $region37: #{tpu_custom_call.1} parent=5 // pred_check
        _
      $region38: #{tpu_custom_call.1} parent=5 // pred_check_branch
        %193 = sbr.rel (%p190) target = $region40
      $region39: #{tpu_custom_call.1} parent=5 // pred_region
        %s194 = ssub.s32 %s14, 1
        %p195 = scmp.lt.s32.totalorder %s19, 1
        %s196 = scalar_select %p195, %s19, 1
        %s197 = smul.addr %s196, 8
        %s198 = scalar_lea.vmem %s0, %s197
        %p199 = pneg %p40
        %p200 = pneg %p37
        %p201 = pneg %p61
        %p202 = pneg %p58
        %p203 = pneg %p82
        %p204 = pneg %p79
        %p205 = pneg %p103
        %p206 = pneg %p100
        %p207 = pneg %p124
        %p208 = pneg %p121
        %p209 = pneg %p150
        %p210 = pneg %p147
        %s211 = sand.u32 %s137, 1
        %s212 = scalar_lea.sflag [#allocation3], %s211
        %s213 = sand.u32 %s137, 1
        %s214 = smul.addr %s213, 8
        %s215 = scalar_lea.vmem [#allocation2], %s214
        %p216 = scmp.lt.s32.totalorder %s19, 1
        %s217 = scalar_select %p216, %s19, 1
        %s218 = smul.addr %s217, 8
        %s219 = scalar_lea.vmem %s0, %s218
        %v220 = vld [vmem:[%s219] sm:$0xff]
        %v221 = vld [vmem:[%s1] sm:$0xff]
        %v222 = vld [vmem:[%s1 + $0x8] sm:$0xff]
        %v223 = vld [vmem:[%s3] sm:$0xff]
        %v224 = vld [vmem:[%s2] sm:$0x1]
        %v226 = vlaneseq
        %v227 = vshrl.u32 %v226, 7
        %v228 = vsub.s32 0, %v227
        %v229 = vrot.slane %v224, %v228
        %v231 = vld [vmem:[%s4] sm:$0x1]
        %v233 = vlaneseq
        %v234 = vshrl.u32 %v233, 7
        %v235 = vsub.s32 0, %v234
        %v236 = vrot.slane %v231, %v235
        %vm238 = vcmask 130048
        %v240 = vsel %vm238, %v220, 0
        %242 = vmatprep.subr.mxu0 0.0
        %243 = vmatpush1.msra.mxu0 0.0
        %244 = vmatprep.subr.mxu0 0.0
        %245 = vmatpush1.msra.mxu0 0.0
        %246 = vmatprep.subr.mxu0 0.0
        %247 = vmatpush1.msra.mxu0 0.0
        %248 = vmatprep.subr.mxu0 0.0
        %249 = vmatpush1.msra.mxu0 0.0
        %250 = vmatprep.subr.mxu0 0.0
        %251 = vmatpush1.msra.mxu0 0.0
        %252 = vmatprep.subr.mxu0 0.0
        %253 = vmatpush1.msra.mxu0 0.0
        %254 = vmatprep.subr.mxu0 0.0
        %255 = vmatpush1.msra.mxu0 0.0
        %256 = vmatprep.subr.mxu0 0.0
        %257 = vmatpush1.msra.mxu0 0.0
        %258 = vmatprep.subr.mxu0 0.0
        %259 = vmatpush1.msra.mxu0 0.0
        %260 = vmatprep.subr.mxu0 0.0
        %261 = vmatpush1.msra.mxu0 0.0
        %262 = vmatprep.subr.mxu0 0.0
        %263 = vmatpush1.msra.mxu0 0.0
        %264 = vmatprep.subr.mxu0 0.0
        %265 = vmatpush1.msra.mxu0 0.0
        %266 = vmatprep.subr.mxu0 0.0
        %267 = vmatpush1.msra.mxu0 0.0
        %268 = vmatprep.subr.mxu0 0.0
        %269 = vmatpush1.msra.mxu0 0.0
        %270 = vmatprep.subr.mxu0 0.0
        %271 = vmatpush1.msra.mxu0 %v222
        %272 = vmatprep.subr.mxu0 0.0
        %273 = vmatpush1.msra.mxu0 %v221
        %274 = vmatprep.subr.mxu0 0.0
        %275 = vmatpush2.msra.mxu0 0.0
        %276 = vmatprep.subr.mxu0 0.0
        %277 = vmatpush2.msra.mxu0 0.0
        %278 = vmatprep.subr.mxu0 0.0
        %279 = vmatpush2.msra.mxu0 0.0
        %280 = vmatprep.subr.mxu0 0.0
        %281 = vmatpush2.msra.mxu0 0.0
        %282 = vmatprep.subr.mxu0 0.0
        %283 = vmatpush2.msra.mxu0 0.0
        %284 = vmatprep.subr.mxu0 0.0
        %285 = vmatpush2.msra.mxu0 0.0
        %286 = vmatprep.subr.mxu0 0.0
        %287 = vmatpush2.msra.mxu0 0.0
        %288 = vmatprep.subr.mxu0 0.0
        %289 = vmatpush2.msra.mxu0 0.0
        %290 = vmatprep.subr.mxu0 0.0
        %291 = vmatpush2.msra.mxu0 0.0
        %292 = vmatprep.subr.mxu0 0.0
        %293 = vmatpush2.msra.mxu0 0.0
        %294 = vmatprep.subr.mxu0 0.0
        %295 = vmatpush2.msra.mxu0 0.0
        %296 = vmatprep.subr.mxu0 0.0
        %297 = vmatpush2.msra.mxu0 0.0
        %298 = vmatprep.subr.mxu0 0.0
        %299 = vmatpush2.msra.mxu0 0.0
        %300 = vmatprep.subr.mxu0 0.0
        %301 = vmatpush2.msra.mxu0 0.0
        %302 = vmatprep.subr.mxu0 0.0
        %303 = vmatpush2.msra.mxu0 0.0
        %304 = vmatprep.subr.mxu0 0.0
        %305 = vmatpush2.msra.mxu0 0.0
        %306 = vmatprep.mubr.f32.mxu0 0.0
        %307 = vmatmul.mubr.f32.gmra.mxu0 %v240
        %v308 = vpop.f32.mrf.mxu0
        %v309 = vadd.f32 %v229, %v308
        %v310 = vpop.f32.mrf.mxu0
        %311 = vdwg.mxu0
        %312 = vmatprep.subr.mxu0 0.0
        %313 = vmatpush1.xpose.msra.mxu0 0.0
        %314 = vmatprep.subr.mxu0 0.0
        %315 = vmatpush1.xpose.msra.mxu0 0.0
        %316 = vmatprep.subr.mxu0 0.0
        %317 = vmatpush1.xpose.msra.mxu0 0.0
        %318 = vmatprep.subr.mxu0 0.0
        %319 = vmatpush1.xpose.msra.mxu0 0.0
        %320 = vmatprep.subr.mxu0 0.0
        %321 = vmatpush1.xpose.msra.mxu0 0.0
        %322 = vmatprep.subr.mxu0 0.0
        %323 = vmatpush1.xpose.msra.mxu0 0.0
        %324 = vmatprep.subr.mxu0 0.0
        %325 = vmatpush1.xpose.msra.mxu0 0.0
        %326 = vmatprep.subr.mxu0 0.0
        %327 = vmatpush1.xpose.msra.mxu0 0.0
        %328 = vmatprep.subr.mxu0 0.0
        %329 = vmatpush1.xpose.msra.mxu0 0.0
        %330 = vmatprep.subr.mxu0 0.0
        %331 = vmatpush1.xpose.msra.mxu0 0.0
        %332 = vmatprep.subr.mxu0 0.0
        %333 = vmatpush1.xpose.msra.mxu0 0.0
        %334 = vmatprep.subr.mxu0 0.0
        %335 = vmatpush1.xpose.msra.mxu0 0.0
        %336 = vmatprep.subr.mxu0 0.0
        %337 = vmatpush1.xpose.msra.mxu0 0.0
        %338 = vmatprep.subr.mxu0 0.0
        %339 = vmatpush1.xpose.msra.mxu0 0.0
        %340 = vmatprep.subr.mxu0 0.0
        %341 = vmatpush1.xpose.msra.mxu0 0.0
        %342 = vmatprep.subr.mxu0 0.0
        %343 = vmatpush1.xpose.msra.mxu0 %v240
        %344 = vmatprep.subr.mxu0 0.0
        %345 = vmatpush2.xpose.msra.mxu0 0.0
        %346 = vmatprep.subr.mxu0 0.0
        %347 = vmatpush2.xpose.msra.mxu0 0.0
        %348 = vmatprep.subr.mxu0 0.0
        %349 = vmatpush2.xpose.msra.mxu0 0.0
        %350 = vmatprep.subr.mxu0 0.0
        %351 = vmatpush2.xpose.msra.mxu0 0.0
        %352 = vmatprep.subr.mxu0 0.0
        %353 = vmatpush2.xpose.msra.mxu0 0.0
        %354 = vmatprep.subr.mxu0 0.0
        %355 = vmatpush2.xpose.msra.mxu0 0.0
        %356 = vmatprep.subr.mxu0 0.0
        %357 = vmatpush2.xpose.msra.mxu0 0.0
        %358 = vmatprep.subr.mxu0 0.0
        %359 = vmatpush2.xpose.msra.mxu0 0.0
        %360 = vmatprep.subr.mxu0 0.0
        %361 = vmatpush2.xpose.msra.mxu0 0.0
        %362 = vmatprep.subr.mxu0 0.0
        %363 = vmatpush2.xpose.msra.mxu0 0.0
        %364 = vmatprep.subr.mxu0 0.0
        %365 = vmatpush2.xpose.msra.mxu0 0.0
        %366 = vmatprep.subr.mxu0 0.0
        %367 = vmatpush2.xpose.msra.mxu0 0.0
        %368 = vmatprep.subr.mxu0 0.0
        %369 = vmatpush2.xpose.msra.mxu0 0.0
        %370 = vmatprep.subr.mxu0 0.0
        %371 = vmatpush2.xpose.msra.mxu0 0.0
        %372 = vmatprep.subr.mxu0 0.0
        %373 = vmatpush2.xpose.msra.mxu0 0.0
        %374 = vmatprep.subr.mxu0 0.0
        %375 = vmatpush2.xpose.msra.mxu0 0.0
        %376 = vmatprep.mubr.f32.mxu0 0.0
        %377 = vmatmul.mubr.f32.gmra.mxu0 %v240
        %v378 = vpop.f32.mrf.mxu0
        %v379 = vadd.f32 0.0, %v378
        %v380 = vpop.f32.mrf.mxu0
        %381 = vdwg.mxu0
        %v382 = vmul.f32 %v379, 0.25
        %vm383 = vcmask 64512
        %v384 = vsel %vm383, %v382, -inf
        %385 = vmax.xlane.f32.xlu0 %v384
        %v386 = vpop.xlane.xlu0 %385
        %v387 = vsub.f32 %v382, %v386
        %v388 = vmul.f32 %v387, 1.442695
        %v389 = vpow.pop %v388
        %v390 = vsel %vm383, %v389, 0.0
        %391 = vadd.xlane.f32.xlu0 %v390
        %v392 = vpop.xlane.xlu0 %391
        %v393 = vrcp.pop %v392
        %v394 = vmul.f32 %v389, %v393
        %v396 = vsel %vm383, %v394, 0
        %398 = vmatprep.subr.mxu0 0.0
        %399 = vmatpush1.msra.mxu0 0.0
        %400 = vmatprep.subr.mxu0 0.0
        %401 = vmatpush1.msra.mxu0 0.0
        %402 = vmatprep.subr.mxu0 0.0
        %403 = vmatpush1.msra.mxu0 0.0
        %404 = vmatprep.subr.mxu0 0.0
        %405 = vmatpush1.msra.mxu0 0.0
        %406 = vmatprep.subr.mxu0 0.0
        %407 = vmatpush1.msra.mxu0 0.0
        %408 = vmatprep.subr.mxu0 0.0
        %409 = vmatpush1.msra.mxu0 0.0
        %410 = vmatprep.subr.mxu0 0.0
        %411 = vmatpush1.msra.mxu0 0.0
        %412 = vmatprep.subr.mxu0 0.0
        %413 = vmatpush1.msra.mxu0 0.0
        %414 = vmatprep.subr.mxu0 0.0
        %415 = vmatpush1.msra.mxu0 0.0
        %416 = vmatprep.subr.mxu0 0.0
        %417 = vmatpush1.msra.mxu0 0.0
        %418 = vmatprep.subr.mxu0 0.0
        %419 = vmatpush1.msra.mxu0 0.0
        %420 = vmatprep.subr.mxu0 0.0
        %421 = vmatpush1.msra.mxu0 0.0
        %422 = vmatprep.subr.mxu0 0.0
        %423 = vmatpush1.msra.mxu0 0.0
        %424 = vmatprep.subr.mxu0 0.0
        %425 = vmatpush1.msra.mxu0 0.0
        %426 = vmatprep.subr.mxu0 0.0
        %427 = vmatpush1.msra.mxu0 0.0
        %428 = vmatprep.subr.mxu0 0.0
        %429 = vmatpush1.msra.mxu0 %v309
        %430 = vmatprep.subr.mxu0 0.0
        %431 = vmatpush2.msra.mxu0 0.0
        %432 = vmatprep.subr.mxu0 0.0
        %433 = vmatpush2.msra.mxu0 0.0
        %434 = vmatprep.subr.mxu0 0.0
        %435 = vmatpush2.msra.mxu0 0.0
        %436 = vmatprep.subr.mxu0 0.0
        %437 = vmatpush2.msra.mxu0 0.0
        %438 = vmatprep.subr.mxu0 0.0
        %439 = vmatpush2.msra.mxu0 0.0
        %440 = vmatprep.subr.mxu0 0.0
        %441 = vmatpush2.msra.mxu0 0.0
        %442 = vmatprep.subr.mxu0 0.0
        %443 = vmatpush2.msra.mxu0 0.0
        %444 = vmatprep.subr.mxu0 0.0
        %445 = vmatpush2.msra.mxu0 0.0
        %446 = vmatprep.subr.mxu0 0.0
        %447 = vmatpush2.msra.mxu0 0.0
        %448 = vmatprep.subr.mxu0 0.0
        %449 = vmatpush2.msra.mxu0 0.0
        %450 = vmatprep.subr.mxu0 0.0
        %451 = vmatpush2.msra.mxu0 0.0
        %452 = vmatprep.subr.mxu0 0.0
        %453 = vmatpush2.msra.mxu0 0.0
        %454 = vmatprep.subr.mxu0 0.0
        %455 = vmatpush2.msra.mxu0 0.0
        %456 = vmatprep.subr.mxu0 0.0
        %457 = vmatpush2.msra.mxu0 0.0
        %458 = vmatprep.subr.mxu0 0.0
        %459 = vmatpush2.msra.mxu0 0.0
        %460 = vmatprep.subr.mxu0 0.0
        %461 = vmatpush2.msra.mxu0 0.0
        %462 = vmatprep.mubr.f32.mxu0 0.0
        %463 = vmatmul.mubr.f32.gmra.mxu0 %v396
        %v464 = vpop.f32.mrf.mxu0
        %v465 = vadd.f32 0.0, %v464
        %v466 = vpop.f32.mrf.mxu0
        %467 = vdwg.mxu0
        %v469 = vsel %vm383, %v465, 0
        %471 = vmatprep.subr.mxu0 0.0
        %472 = vmatpush1.msra.mxu0 0.0
        %473 = vmatprep.subr.mxu0 0.0
        %474 = vmatpush1.msra.mxu0 0.0
        %475 = vmatprep.subr.mxu0 0.0
        %476 = vmatpush1.msra.mxu0 0.0
        %477 = vmatprep.subr.mxu0 0.0
        %478 = vmatpush1.msra.mxu0 0.0
        %479 = vmatprep.subr.mxu0 0.0
        %480 = vmatpush1.msra.mxu0 0.0
        %481 = vmatprep.subr.mxu0 0.0
        %482 = vmatpush1.msra.mxu0 0.0
        %483 = vmatprep.subr.mxu0 0.0
        %484 = vmatpush1.msra.mxu0 0.0
        %485 = vmatprep.subr.mxu0 0.0
        %486 = vmatpush1.msra.mxu0 0.0
        %487 = vmatprep.subr.mxu0 0.0
        %488 = vmatpush1.msra.mxu0 0.0
        %489 = vmatprep.subr.mxu0 0.0
        %490 = vmatpush1.msra.mxu0 0.0
        %491 = vmatprep.subr.mxu0 0.0
        %492 = vmatpush1.msra.mxu0 0.0
        %493 = vmatprep.subr.mxu0 0.0
        %494 = vmatpush1.msra.mxu0 0.0
        %495 = vmatprep.subr.mxu0 0.0
        %496 = vmatpush1.msra.mxu0 0.0
        %497 = vmatprep.subr.mxu0 0.0
        %498 = vmatpush1.msra.mxu0 0.0
        %499 = vmatprep.subr.mxu0 0.0
        %500 = vmatpush1.msra.mxu0 0.0
        %501 = vmatprep.subr.mxu0 0.0
        %502 = vmatpush1.msra.mxu0 %v223
        %503 = vmatprep.subr.mxu0 0.0
        %504 = vmatpush2.msra.mxu0 0.0
        %505 = vmatprep.subr.mxu0 0.0
        %506 = vmatpush2.msra.mxu0 0.0
        %507 = vmatprep.subr.mxu0 0.0
        %508 = vmatpush2.msra.mxu0 0.0
        %509 = vmatprep.subr.mxu0 0.0
        %510 = vmatpush2.msra.mxu0 0.0
        %511 = vmatprep.subr.mxu0 0.0
        %512 = vmatpush2.msra.mxu0 0.0
        %513 = vmatprep.subr.mxu0 0.0
        %514 = vmatpush2.msra.mxu0 0.0
        %515 = vmatprep.subr.mxu0 0.0
        %516 = vmatpush2.msra.mxu0 0.0
        %517 = vmatprep.subr.mxu0 0.0
        %518 = vmatpush2.msra.mxu0 0.0
        %519 = vmatprep.subr.mxu0 0.0
        %520 = vmatpush2.msra.mxu0 0.0
        %521 = vmatprep.subr.mxu0 0.0
        %522 = vmatpush2.msra.mxu0 0.0
        %523 = vmatprep.subr.mxu0 0.0
        %524 = vmatpush2.msra.mxu0 0.0
        %525 = vmatprep.subr.mxu0 0.0
        %526 = vmatpush2.msra.mxu0 0.0
        %527 = vmatprep.subr.mxu0 0.0
        %528 = vmatpush2.msra.mxu0 0.0
        %529 = vmatprep.subr.mxu0 0.0
        %530 = vmatpush2.msra.mxu0 0.0
        %531 = vmatprep.subr.mxu0 0.0
        %532 = vmatpush2.msra.mxu0 0.0
        %533 = vmatprep.subr.mxu0 0.0
        %534 = vmatpush2.msra.mxu0 0.0
        %535 = vmatprep.mubr.f32.mxu0 0.0
        %536 = vmatmul.mubr.f32.gmra.mxu0 %v469
        %v537 = vpop.f32.mrf.mxu0
        %v538 = vadd.f32 %v236, %v537
        %v539 = vpop.f32.mrf.mxu0
        %540 = vdwg.mxu0
        %v541 = vmax.f32 %v538, 0.0
        %v542 = vadd.f32 %v541, %v220
        %v544 = vsel %vm238, %v542, 0
        %546 = vmatprep.subr.mxu0 0.0
        %547 = vmatpush1.msra.mxu0 0.0
        %548 = vmatprep.subr.mxu0 0.0
        %549 = vmatpush1.msra.mxu0 0.0
        %550 = vmatprep.subr.mxu0 0.0
        %551 = vmatpush1.msra.mxu0 0.0
        %552 = vmatprep.subr.mxu0 0.0
        %553 = vmatpush1.msra.mxu0 0.0
        %554 = vmatprep.subr.mxu0 0.0
        %555 = vmatpush1.msra.mxu0 0.0
        %556 = vmatprep.subr.mxu0 0.0
        %557 = vmatpush1.msra.mxu0 0.0
        %558 = vmatprep.subr.mxu0 0.0
        %559 = vmatpush1.msra.mxu0 0.0
        %560 = vmatprep.subr.mxu0 0.0
        %561 = vmatpush1.msra.mxu0 0.0
        %562 = vmatprep.subr.mxu0 0.0
        %563 = vmatpush1.msra.mxu0 0.0
        %564 = vmatprep.subr.mxu0 0.0
        %565 = vmatpush1.msra.mxu0 0.0
        %566 = vmatprep.subr.mxu0 0.0
        %567 = vmatpush1.msra.mxu0 0.0
        %568 = vmatprep.subr.mxu0 0.0
        %569 = vmatpush1.msra.mxu0 0.0
        %570 = vmatprep.subr.mxu0 0.0
        %571 = vmatpush1.msra.mxu0 0.0
        %572 = vmatprep.subr.mxu0 0.0
        %573 = vmatpush1.msra.mxu0 0.0
        %574 = vmatprep.subr.mxu0 0.0
        %575 = vmatpush1.msra.mxu0 %v222
        %576 = vmatprep.subr.mxu0 0.0
        %577 = vmatpush1.msra.mxu0 %v221
        %578 = vmatprep.subr.mxu0 0.0
        %579 = vmatpush2.msra.mxu0 0.0
        %580 = vmatprep.subr.mxu0 0.0
        %581 = vmatpush2.msra.mxu0 0.0
        %582 = vmatprep.subr.mxu0 0.0
        %583 = vmatpush2.msra.mxu0 0.0
        %584 = vmatprep.subr.mxu0 0.0
        %585 = vmatpush2.msra.mxu0 0.0
        %586 = vmatprep.subr.mxu0 0.0
        %587 = vmatpush2.msra.mxu0 0.0
        %588 = vmatprep.subr.mxu0 0.0
        %589 = vmatpush2.msra.mxu0 0.0
        %590 = vmatprep.subr.mxu0 0.0
        %591 = vmatpush2.msra.mxu0 0.0
        %592 = vmatprep.subr.mxu0 0.0
        %593 = vmatpush2.msra.mxu0 0.0
        %594 = vmatprep.subr.mxu0 0.0
        %595 = vmatpush2.msra.mxu0 0.0
        %596 = vmatprep.subr.mxu0 0.0
        %597 = vmatpush2.msra.mxu0 0.0
        %598 = vmatprep.subr.mxu0 0.0
        %599 = vmatpush2.msra.mxu0 0.0
        %600 = vmatprep.subr.mxu0 0.0
        %601 = vmatpush2.msra.mxu0 0.0
        %602 = vmatprep.subr.mxu0 0.0
        %603 = vmatpush2.msra.mxu0 0.0
        %604 = vmatprep.subr.mxu0 0.0
        %605 = vmatpush2.msra.mxu0 0.0
        %606 = vmatprep.subr.mxu0 0.0
        %607 = vmatpush2.msra.mxu0 0.0
        %608 = vmatprep.subr.mxu0 0.0
        %609 = vmatpush2.msra.mxu0 0.0
        %610 = vmatprep.mubr.f32.mxu0 0.0
        %611 = vmatmul.mubr.f32.gmra.mxu0 %v544
        %v612 = vpop.f32.mrf.mxu0
        %v613 = vadd.f32 %v229, %v612
        %v614 = vpop.f32.mrf.mxu0
        %615 = vdwg.mxu0
        %616 = vmatprep.subr.mxu0 0.0
        %617 = vmatpush1.xpose.msra.mxu0 0.0
        %618 = vmatprep.subr.mxu0 0.0
        %619 = vmatpush1.xpose.msra.mxu0 0.0
        %620 = vmatprep.subr.mxu0 0.0
        %621 = vmatpush1.xpose.msra.mxu0 0.0
        %622 = vmatprep.subr.mxu0 0.0
        %623 = vmatpush1.xpose.msra.mxu0 0.0
        %624 = vmatprep.subr.mxu0 0.0
        %625 = vmatpush1.xpose.msra.mxu0 0.0
        %626 = vmatprep.subr.mxu0 0.0
        %627 = vmatpush1.xpose.msra.mxu0 0.0
        %628 = vmatprep.subr.mxu0 0.0
        %629 = vmatpush1.xpose.msra.mxu0 0.0
        %630 = vmatprep.subr.mxu0 0.0
        %631 = vmatpush1.xpose.msra.mxu0 0.0
        %632 = vmatprep.subr.mxu0 0.0
        %633 = vmatpush1.xpose.msra.mxu0 0.0
        %634 = vmatprep.subr.mxu0 0.0
        %635 = vmatpush1.xpose.msra.mxu0 0.0
        %636 = vmatprep.subr.mxu0 0.0
        %637 = vmatpush1.xpose.msra.mxu0 0.0
        %638 = vmatprep.subr.mxu0 0.0
        %639 = vmatpush1.xpose.msra.mxu0 0.0
        %640 = vmatprep.subr.mxu0 0.0
        %641 = vmatpush1.xpose.msra.mxu0 0.0
        %642 = vmatprep.subr.mxu0 0.0
        %643 = vmatpush1.xpose.msra.mxu0 0.0
        %644 = vmatprep.subr.mxu0 0.0
        %645 = vmatpush1.xpose.msra.mxu0 0.0
        %646 = vmatprep.subr.mxu0 0.0
        %647 = vmatpush1.xpose.msra.mxu0 %v544
        %648 = vmatprep.subr.mxu0 0.0
        %649 = vmatpush2.xpose.msra.mxu0 0.0
        %650 = vmatprep.subr.mxu0 0.0
        %651 = vmatpush2.xpose.msra.mxu0 0.0
        %652 = vmatprep.subr.mxu0 0.0
        %653 = vmatpush2.xpose.msra.mxu0 0.0
        %654 = vmatprep.subr.mxu0 0.0
        %655 = vmatpush2.xpose.msra.mxu0 0.0
        %656 = vmatprep.subr.mxu0 0.0
        %657 = vmatpush2.xpose.msra.mxu0 0.0
        %658 = vmatprep.subr.mxu0 0.0
        %659 = vmatpush2.xpose.msra.mxu0 0.0
        %660 = vmatprep.subr.mxu0 0.0
        %661 = vmatpush2.xpose.msra.mxu0 0.0
        %662 = vmatprep.subr.mxu0 0.0
        %663 = vmatpush2.xpose.msra.mxu0 0.0
        %664 = vmatprep.subr.mxu0 0.0
        %665 = vmatpush2.xpose.msra.mxu0 0.0
        %666 = vmatprep.subr.mxu0 0.0
        %667 = vmatpush2.xpose.msra.mxu0 0.0
        %668 = vmatprep.subr.mxu0 0.0
        %669 = vmatpush2.xpose.msra.mxu0 0.0
        %670 = vmatprep.subr.mxu0 0.0
        %671 = vmatpush2.xpose.msra.mxu0 0.0
        %672 = vmatprep.subr.mxu0 0.0
        %673 = vmatpush2.xpose.msra.mxu0 0.0
        %674 = vmatprep.subr.mxu0 0.0
        %675 = vmatpush2.xpose.msra.mxu0 0.0
        %676 = vmatprep.subr.mxu0 0.0
        %677 = vmatpush2.xpose.msra.mxu0 0.0
        %678 = vmatprep.subr.mxu0 0.0
        %679 = vmatpush2.xpose.msra.mxu0 0.0
        %680 = vmatprep.mubr.f32.mxu0 0.0
        %681 = vmatmul.mubr.f32.gmra.mxu0 %v544
        %v682 = vpop.f32.mrf.mxu0
        %v683 = vadd.f32 0.0, %v682
        %v684 = vpop.f32.mrf.mxu0
        %685 = vdwg.mxu0
        %v686 = vmul.f32 %v683, 0.25
        %v687 = vsel %vm383, %v686, -inf
        %688 = vmax.xlane.f32.xlu0 %v687
        %v689 = vpop.xlane.xlu0 %688
        %v690 = vsub.f32 %v686, %v689
        %v691 = vmul.f32 %v690, 1.442695
        %v692 = vpow.pop %v691
        %v693 = vsel %vm383, %v692, 0.0
        %694 = vadd.xlane.f32.xlu0 %v693
        %v695 = vpop.xlane.xlu0 %694
        %v696 = vrcp.pop %v695
        %v697 = vmul.f32 %v692, %v696
        %v699 = vsel %vm383, %v697, 0
        %701 = vmatprep.subr.mxu0 0.0
        %702 = vmatpush1.msra.mxu0 0.0
        %703 = vmatprep.subr.mxu0 0.0
        %704 = vmatpush1.msra.mxu0 0.0
        %705 = vmatprep.subr.mxu0 0.0
        %706 = vmatpush1.msra.mxu0 0.0
        %707 = vmatprep.subr.mxu0 0.0
        %708 = vmatpush1.msra.mxu0 0.0
        %709 = vmatprep.subr.mxu0 0.0
        %710 = vmatpush1.msra.mxu0 0.0
        %711 = vmatprep.subr.mxu0 0.0
        %712 = vmatpush1.msra.mxu0 0.0
        %713 = vmatprep.subr.mxu0 0.0
        %714 = vmatpush1.msra.mxu0 0.0
        %715 = vmatprep.subr.mxu0 0.0
        %716 = vmatpush1.msra.mxu0 0.0
        %717 = vmatprep.subr.mxu0 0.0
        %718 = vmatpush1.msra.mxu0 0.0
        %719 = vmatprep.subr.mxu0 0.0
        %720 = vmatpush1.msra.mxu0 0.0
        %721 = vmatprep.subr.mxu0 0.0
        %722 = vmatpush1.msra.mxu0 0.0
        %723 = vmatprep.subr.mxu0 0.0
        %724 = vmatpush1.msra.mxu0 0.0
        %725 = vmatprep.subr.mxu0 0.0
        %726 = vmatpush1.msra.mxu0 0.0
        %727 = vmatprep.subr.mxu0 0.0
        %728 = vmatpush1.msra.mxu0 0.0
        %729 = vmatprep.subr.mxu0 0.0
        %730 = vmatpush1.msra.mxu0 0.0
        %731 = vmatprep.subr.mxu0 0.0
        %732 = vmatpush1.msra.mxu0 %v613
        %733 = vmatprep.subr.mxu0 0.0
        %734 = vmatpush2.msra.mxu0 0.0
        %735 = vmatprep.subr.mxu0 0.0
        %736 = vmatpush2.msra.mxu0 0.0
        %737 = vmatprep.subr.mxu0 0.0
        %738 = vmatpush2.msra.mxu0 0.0
        %739 = vmatprep.subr.mxu0 0.0
        %740 = vmatpush2.msra.mxu0 0.0
        %741 = vmatprep.subr.mxu0 0.0
        %742 = vmatpush2.msra.mxu0 0.0
        %743 = vmatprep.subr.mxu0 0.0
        %744 = vmatpush2.msra.mxu0 0.0
        %745 = vmatprep.subr.mxu0 0.0
        %746 = vmatpush2.msra.mxu0 0.0
        %747 = vmatprep.subr.mxu0 0.0
        %748 = vmatpush2.msra.mxu0 0.0
        %749 = vmatprep.subr.mxu0 0.0
        %750 = vmatpush2.msra.mxu0 0.0
        %751 = vmatprep.subr.mxu0 0.0
        %752 = vmatpush2.msra.mxu0 0.0
        %753 = vmatprep.subr.mxu0 0.0
        %754 = vmatpush2.msra.mxu0 0.0
        %755 = vmatprep.subr.mxu0 0.0
        %756 = vmatpush2.msra.mxu0 0.0
        %757 = vmatprep.subr.mxu0 0.0
        %758 = vmatpush2.msra.mxu0 0.0
        %759 = vmatprep.subr.mxu0 0.0
        %760 = vmatpush2.msra.mxu0 0.0
        %761 = vmatprep.subr.mxu0 0.0
        %762 = vmatpush2.msra.mxu0 0.0
        %763 = vmatprep.subr.mxu0 0.0
        %764 = vmatpush2.msra.mxu0 0.0
        %765 = vmatprep.mubr.f32.mxu0 0.0
        %766 = vmatmul.mubr.f32.gmra.mxu0 %v699
        %v767 = vpop.f32.mrf.mxu0
        %v768 = vadd.f32 0.0, %v767
        %v769 = vpop.f32.mrf.mxu0
        %770 = vdwg.mxu0
        %v772 = vsel %vm383, %v768, 0
        %774 = vmatprep.subr.mxu0 0.0
        %775 = vmatpush1.msra.mxu0 0.0
        %776 = vmatprep.subr.mxu0 0.0
        %777 = vmatpush1.msra.mxu0 0.0
        %778 = vmatprep.subr.mxu0 0.0
        %779 = vmatpush1.msra.mxu0 0.0
        %780 = vmatprep.subr.mxu0 0.0
        %781 = vmatpush1.msra.mxu0 0.0
        %782 = vmatprep.subr.mxu0 0.0
        %783 = vmatpush1.msra.mxu0 0.0
        %784 = vmatprep.subr.mxu0 0.0
        %785 = vmatpush1.msra.mxu0 0.0
        %786 = vmatprep.subr.mxu0 0.0
        %787 = vmatpush1.msra.mxu0 0.0
        %788 = vmatprep.subr.mxu0 0.0
        %789 = vmatpush1.msra.mxu0 0.0
        %790 = vmatprep.subr.mxu0 0.0
        %791 = vmatpush1.msra.mxu0 0.0
        %792 = vmatprep.subr.mxu0 0.0
        %793 = vmatpush1.msra.mxu0 0.0
        %794 = vmatprep.subr.mxu0 0.0
        %795 = vmatpush1.msra.mxu0 0.0
        %796 = vmatprep.subr.mxu0 0.0
        %797 = vmatpush1.msra.mxu0 0.0
        %798 = vmatprep.subr.mxu0 0.0
        %799 = vmatpush1.msra.mxu0 0.0
        %800 = vmatprep.subr.mxu0 0.0
        %801 = vmatpush1.msra.mxu0 0.0
        %802 = vmatprep.subr.mxu0 0.0
        %803 = vmatpush1.msra.mxu0 0.0
        %804 = vmatprep.subr.mxu0 0.0
        %805 = vmatpush1.msra.mxu0 %v223
        %806 = vmatprep.subr.mxu0 0.0
        %807 = vmatpush2.msra.mxu0 0.0
        %808 = vmatprep.subr.mxu0 0.0
        %809 = vmatpush2.msra.mxu0 0.0
        %810 = vmatprep.subr.mxu0 0.0
        %811 = vmatpush2.msra.mxu0 0.0
        %812 = vmatprep.subr.mxu0 0.0
        %813 = vmatpush2.msra.mxu0 0.0
        %814 = vmatprep.subr.mxu0 0.0
        %815 = vmatpush2.msra.mxu0 0.0
        %816 = vmatprep.subr.mxu0 0.0
        %817 = vmatpush2.msra.mxu0 0.0
        %818 = vmatprep.subr.mxu0 0.0
        %819 = vmatpush2.msra.mxu0 0.0
        %820 = vmatprep.subr.mxu0 0.0
        %821 = vmatpush2.msra.mxu0 0.0
        %822 = vmatprep.subr.mxu0 0.0
        %823 = vmatpush2.msra.mxu0 0.0
        %824 = vmatprep.subr.mxu0 0.0
        %825 = vmatpush2.msra.mxu0 0.0
        %826 = vmatprep.subr.mxu0 0.0
        %827 = vmatpush2.msra.mxu0 0.0
        %828 = vmatprep.subr.mxu0 0.0
        %829 = vmatpush2.msra.mxu0 0.0
        %830 = vmatprep.subr.mxu0 0.0
        %831 = vmatpush2.msra.mxu0 0.0
        %832 = vmatprep.subr.mxu0 0.0
        %833 = vmatpush2.msra.mxu0 0.0
        %834 = vmatprep.subr.mxu0 0.0
        %835 = vmatpush2.msra.mxu0 0.0
        %836 = vmatprep.subr.mxu0 0.0
        %837 = vmatpush2.msra.mxu0 0.0
        %838 = vmatprep.mubr.f32.mxu0 0.0
        %839 = vmatmul.mubr.f32.gmra.mxu0 %v772
        %v840 = vpop.f32.mrf.mxu0
        %v841 = vadd.f32 %v236, %v840
        %v842 = vpop.f32.mrf.mxu0
        %843 = vdwg.mxu0
        %v844 = vmax.f32 %v841, 0.0
        %v845 = vadd.f32 %v844, %v542
        %v847 = vsel %vm238, %v845, 0
        %849 = vmatprep.subr.mxu0 0.0
        %850 = vmatpush1.msra.mxu0 0.0
        %851 = vmatprep.subr.mxu0 0.0
        %852 = vmatpush1.msra.mxu0 0.0
        %853 = vmatprep.subr.mxu0 0.0
        %854 = vmatpush1.msra.mxu0 0.0
        %855 = vmatprep.subr.mxu0 0.0
        %856 = vmatpush1.msra.mxu0 0.0
        %857 = vmatprep.subr.mxu0 0.0
        %858 = vmatpush1.msra.mxu0 0.0
        %859 = vmatprep.subr.mxu0 0.0
        %860 = vmatpush1.msra.mxu0 0.0
        %861 = vmatprep.subr.mxu0 0.0
        %862 = vmatpush1.msra.mxu0 0.0
        %863 = vmatprep.subr.mxu0 0.0
        %864 = vmatpush1.msra.mxu0 0.0
        %865 = vmatprep.subr.mxu0 0.0
        %866 = vmatpush1.msra.mxu0 0.0
        %867 = vmatprep.subr.mxu0 0.0
        %868 = vmatpush1.msra.mxu0 0.0
        %869 = vmatprep.subr.mxu0 0.0
        %870 = vmatpush1.msra.mxu0 0.0
        %871 = vmatprep.subr.mxu0 0.0
        %872 = vmatpush1.msra.mxu0 0.0
        %873 = vmatprep.subr.mxu0 0.0
        %874 = vmatpush1.msra.mxu0 0.0
        %875 = vmatprep.subr.mxu0 0.0
        %876 = vmatpush1.msra.mxu0 0.0
        %877 = vmatprep.subr.mxu0 0.0
        %878 = vmatpush1.msra.mxu0 %v222
        %879 = vmatprep.subr.mxu0 0.0
        %880 = vmatpush1.msra.mxu0 %v221
        %881 = vmatprep.subr.mxu0 0.0
        %882 = vmatpush2.msra.mxu0 0.0
        %883 = vmatprep.subr.mxu0 0.0
        %884 = vmatpush2.msra.mxu0 0.0
        %885 = vmatprep.subr.mxu0 0.0
        %886 = vmatpush2.msra.mxu0 0.0
        %887 = vmatprep.subr.mxu0 0.0
        %888 = vmatpush2.msra.mxu0 0.0
        %889 = vmatprep.subr.mxu0 0.0
        %890 = vmatpush2.msra.mxu0 0.0
        %891 = vmatprep.subr.mxu0 0.0
        %892 = vmatpush2.msra.mxu0 0.0
        %893 = vmatprep.subr.mxu0 0.0
        %894 = vmatpush2.msra.mxu0 0.0
        %895 = vmatprep.subr.mxu0 0.0
        %896 = vmatpush2.msra.mxu0 0.0
        %897 = vmatprep.subr.mxu0 0.0
        %898 = vmatpush2.msra.mxu0 0.0
        %899 = vmatprep.subr.mxu0 0.0
        %900 = vmatpush2.msra.mxu0 0.0
        %901 = vmatprep.subr.mxu0 0.0
        %902 = vmatpush2.msra.mxu0 0.0
        %903 = vmatprep.subr.mxu0 0.0
        %904 = vmatpush2.msra.mxu0 0.0
        %905 = vmatprep.subr.mxu0 0.0
        %906 = vmatpush2.msra.mxu0 0.0
        %907 = vmatprep.subr.mxu0 0.0
        %908 = vmatpush2.msra.mxu0 0.0
        %909 = vmatprep.subr.mxu0 0.0
        %910 = vmatpush2.msra.mxu0 0.0
        %911 = vmatprep.subr.mxu0 0.0
        %912 = vmatpush2.msra.mxu0 0.0
        %913 = vmatprep.mubr.f32.mxu0 0.0
        %914 = vmatmul.mubr.f32.gmra.mxu0 %v847
        %v915 = vpop.f32.mrf.mxu0
        %v916 = vadd.f32 %v229, %v915
        %v917 = vpop.f32.mrf.mxu0
        %918 = vdwg.mxu0
        %919 = vmatprep.subr.mxu0 0.0
        %920 = vmatpush1.xpose.msra.mxu0 0.0
        %921 = vmatprep.subr.mxu0 0.0
        %922 = vmatpush1.xpose.msra.mxu0 0.0
        %923 = vmatprep.subr.mxu0 0.0
        %924 = vmatpush1.xpose.msra.mxu0 0.0
        %925 = vmatprep.subr.mxu0 0.0
        %926 = vmatpush1.xpose.msra.mxu0 0.0
        %927 = vmatprep.subr.mxu0 0.0
        %928 = vmatpush1.xpose.msra.mxu0 0.0
        %929 = vmatprep.subr.mxu0 0.0
        %930 = vmatpush1.xpose.msra.mxu0 0.0
        %931 = vmatprep.subr.mxu0 0.0
        %932 = vmatpush1.xpose.msra.mxu0 0.0
        %933 = vmatprep.subr.mxu0 0.0
        %934 = vmatpush1.xpose.msra.mxu0 0.0
        %935 = vmatprep.subr.mxu0 0.0
        %936 = vmatpush1.xpose.msra.mxu0 0.0
        %937 = vmatprep.subr.mxu0 0.0
        %938 = vmatpush1.xpose.msra.mxu0 0.0
        %939 = vmatprep.subr.mxu0 0.0
        %940 = vmatpush1.xpose.msra.mxu0 0.0
        %941 = vmatprep.subr.mxu0 0.0
        %942 = vmatpush1.xpose.msra.mxu0 0.0
        %943 = vmatprep.subr.mxu0 0.0
        %944 = vmatpush1.xpose.msra.mxu0 0.0
        %945 = vmatprep.subr.mxu0 0.0
        %946 = vmatpush1.xpose.msra.mxu0 0.0
        %947 = vmatprep.subr.mxu0 0.0
        %948 = vmatpush1.xpose.msra.mxu0 0.0
        %949 = vmatprep.subr.mxu0 0.0
        %950 = vmatpush1.xpose.msra.mxu0 %v847
        %951 = vmatprep.subr.mxu0 0.0
        %952 = vmatpush2.xpose.msra.mxu0 0.0
        %953 = vmatprep.subr.mxu0 0.0
        %954 = vmatpush2.xpose.msra.mxu0 0.0
        %955 = vmatprep.subr.mxu0 0.0
        %956 = vmatpush2.xpose.msra.mxu0 0.0
        %957 = vmatprep.subr.mxu0 0.0
        %958 = vmatpush2.xpose.msra.mxu0 0.0
        %959 = vmatprep.subr.mxu0 0.0
        %960 = vmatpush2.xpose.msra.mxu0 0.0
        %961 = vmatprep.subr.mxu0 0.0
        %962 = vmatpush2.xpose.msra.mxu0 0.0
        %963 = vmatprep.subr.mxu0 0.0
        %964 = vmatpush2.xpose.msra.mxu0 0.0
        %965 = vmatprep.subr.mxu0 0.0
        %966 = vmatpush2.xpose.msra.mxu0 0.0
        %967 = vmatprep.subr.mxu0 0.0
        %968 = vmatpush2.xpose.msra.mxu0 0.0
        %969 = vmatprep.subr.mxu0 0.0
        %970 = vmatpush2.xpose.msra.mxu0 0.0
        %971 = vmatprep.subr.mxu0 0.0
        %972 = vmatpush2.xpose.msra.mxu0 0.0
        %973 = vmatprep.subr.mxu0 0.0
        %974 = vmatpush2.xpose.msra.mxu0 0.0
        %975 = vmatprep.subr.mxu0 0.0
        %976 = vmatpush2.xpose.msra.mxu0 0.0
        %977 = vmatprep.subr.mxu0 0.0
        %978 = vmatpush2.xpose.msra.mxu0 0.0
        %979 = vmatprep.subr.mxu0 0.0
        %980 = vmatpush2.xpose.msra.mxu0 0.0
        %981 = vmatprep.subr.mxu0 0.0
        %982 = vmatpush2.xpose.msra.mxu0 0.0
        %983 = vmatprep.mubr.f32.mxu0 0.0
        %984 = vmatmul.mubr.f32.gmra.mxu0 %v847
        %v985 = vpop.f32.mrf.mxu0
        %v986 = vadd.f32 0.0, %v985
        %v987 = vpop.f32.mrf.mxu0
        %988 = vdwg.mxu0
        %v989 = vmul.f32 %v986, 0.25
        %v990 = vsel %vm383, %v989, -inf
        %991 = vmax.xlane.f32.xlu0 %v990
        %v992 = vpop.xlane.xlu0 %991
        %v993 = vsub.f32 %v989, %v992
        %v994 = vmul.f32 %v993, 1.442695
        %v995 = vpow.pop %v994
        %v996 = vsel %vm383, %v995, 0.0
        %997 = vadd.xlane.f32.xlu0 %v996
        %v998 = vpop.xlane.xlu0 %997
        %v999 = vrcp.pop %v998
        %v1000 = vmul.f32 %v995, %v999
        %v1002 = vsel %vm383, %v1000, 0
        %1004 = vmatprep.subr.mxu0 0.0
        %1005 = vmatpush1.msra.mxu0 0.0
        %1006 = vmatprep.subr.mxu0 0.0
        %1007 = vmatpush1.msra.mxu0 0.0
        %1008 = vmatprep.subr.mxu0 0.0
        %1009 = vmatpush1.msra.mxu0 0.0
        %1010 = vmatprep.subr.mxu0 0.0
        %1011 = vmatpush1.msra.mxu0 0.0
        %1012 = vmatprep.subr.mxu0 0.0
        %1013 = vmatpush1.msra.mxu0 0.0
        %1014 = vmatprep.subr.mxu0 0.0
        %1015 = vmatpush1.msra.mxu0 0.0
        %1016 = vmatprep.subr.mxu0 0.0
        %1017 = vmatpush1.msra.mxu0 0.0
        %1018 = vmatprep.subr.mxu0 0.0
        %1019 = vmatpush1.msra.mxu0 0.0
        %1020 = vmatprep.subr.mxu0 0.0
        %1021 = vmatpush1.msra.mxu0 0.0
        %1022 = vmatprep.subr.mxu0 0.0
        %1023 = vmatpush1.msra.mxu0 0.0
        %1024 = vmatprep.subr.mxu0 0.0
        %1025 = vmatpush1.msra.mxu0 0.0
        %1026 = vmatprep.subr.mxu0 0.0
        %1027 = vmatpush1.msra.mxu0 0.0
        %1028 = vmatprep.subr.mxu0 0.0
        %1029 = vmatpush1.msra.mxu0 0.0
        %1030 = vmatprep.subr.mxu0 0.0
        %1031 = vmatpush1.msra.mxu0 0.0
        %1032 = vmatprep.subr.mxu0 0.0
        %1033 = vmatpush1.msra.mxu0 0.0
        %1034 = vmatprep.subr.mxu0 0.0
        %1035 = vmatpush1.msra.mxu0 %v916
        %1036 = vmatprep.subr.mxu0 0.0
        %1037 = vmatpush2.msra.mxu0 0.0
        %1038 = vmatprep.subr.mxu0 0.0
        %1039 = vmatpush2.msra.mxu0 0.0
        %1040 = vmatprep.subr.mxu0 0.0
        %1041 = vmatpush2.msra.mxu0 0.0
        %1042 = vmatprep.subr.mxu0 0.0
        %1043 = vmatpush2.msra.mxu0 0.0
        %1044 = vmatprep.subr.mxu0 0.0
        %1045 = vmatpush2.msra.mxu0 0.0
        %1046 = vmatprep.subr.mxu0 0.0
        %1047 = vmatpush2.msra.mxu0 0.0
        %1048 = vmatprep.subr.mxu0 0.0
        %1049 = vmatpush2.msra.mxu0 0.0
        %1050 = vmatprep.subr.mxu0 0.0
        %1051 = vmatpush2.msra.mxu0 0.0
        %1052 = vmatprep.subr.mxu0 0.0
        %1053 = vmatpush2.msra.mxu0 0.0
        %1054 = vmatprep.subr.mxu0 0.0
        %1055 = vmatpush2.msra.mxu0 0.0
        %1056 = vmatprep.subr.mxu0 0.0
        %1057 = vmatpush2.msra.mxu0 0.0
        %1058 = vmatprep.subr.mxu0 0.0
        %1059 = vmatpush2.msra.mxu0 0.0
        %1060 = vmatprep.subr.mxu0 0.0
        %1061 = vmatpush2.msra.mxu0 0.0
        %1062 = vmatprep.subr.mxu0 0.0
        %1063 = vmatpush2.msra.mxu0 0.0
        %1064 = vmatprep.subr.mxu0 0.0
        %1065 = vmatpush2.msra.mxu0 0.0
        %1066 = vmatprep.subr.mxu0 0.0
        %1067 = vmatpush2.msra.mxu0 0.0
        %1068 = vmatprep.mubr.f32.mxu0 0.0
        %1069 = vmatmul.mubr.f32.gmra.mxu0 %v1002
        %v1070 = vpop.f32.mrf.mxu0
        %v1071 = vadd.f32 0.0, %v1070
        %v1072 = vpop.f32.mrf.mxu0
        %1073 = vdwg.mxu0
        %v1075 = vsel %vm383, %v1071, 0
        %1077 = vmatprep.subr.mxu0 0.0
        %1078 = vmatpush1.msra.mxu0 0.0
        %1079 = vmatprep.subr.mxu0 0.0
        %1080 = vmatpush1.msra.mxu0 0.0
        %1081 = vmatprep.subr.mxu0 0.0
        %1082 = vmatpush1.msra.mxu0 0.0
        %1083 = vmatprep.subr.mxu0 0.0
        %1084 = vmatpush1.msra.mxu0 0.0
        %1085 = vmatprep.subr.mxu0 0.0
        %1086 = vmatpush1.msra.mxu0 0.0
        %1087 = vmatprep.subr.mxu0 0.0
        %1088 = vmatpush1.msra.mxu0 0.0
        %1089 = vmatprep.subr.mxu0 0.0
        %1090 = vmatpush1.msra.mxu0 0.0
        %1091 = vmatprep.subr.mxu0 0.0
        %1092 = vmatpush1.msra.mxu0 0.0
        %1093 = vmatprep.subr.mxu0 0.0
        %1094 = vmatpush1.msra.mxu0 0.0
        %1095 = vmatprep.subr.mxu0 0.0
        %1096 = vmatpush1.msra.mxu0 0.0
        %1097 = vmatprep.subr.mxu0 0.0
        %1098 = vmatpush1.msra.mxu0 0.0
        %1099 = vmatprep.subr.mxu0 0.0
        %1100 = vmatpush1.msra.mxu0 0.0
        %1101 = vmatprep.subr.mxu0 0.0
        %1102 = vmatpush1.msra.mxu0 0.0
        %1103 = vmatprep.subr.mxu0 0.0
        %1104 = vmatpush1.msra.mxu0 0.0
        %1105 = vmatprep.subr.mxu0 0.0
        %1106 = vmatpush1.msra.mxu0 0.0
        %1107 = vmatprep.subr.mxu0 0.0
        %1108 = vmatpush1.msra.mxu0 %v223
        %1109 = vmatprep.subr.mxu0 0.0
        %1110 = vmatpush2.msra.mxu0 0.0
        %1111 = vmatprep.subr.mxu0 0.0
        %1112 = vmatpush2.msra.mxu0 0.0
        %1113 = vmatprep.subr.mxu0 0.0
        %1114 = vmatpush2.msra.mxu0 0.0
        %1115 = vmatprep.subr.mxu0 0.0
        %1116 = vmatpush2.msra.mxu0 0.0
        %1117 = vmatprep.subr.mxu0 0.0
        %1118 = vmatpush2.msra.mxu0 0.0
        %1119 = vmatprep.subr.mxu0 0.0
        %1120 = vmatpush2.msra.mxu0 0.0
        %1121 = vmatprep.subr.mxu0 0.0
        %1122 = vmatpush2.msra.mxu0 0.0
        %1123 = vmatprep.subr.mxu0 0.0
        %1124 = vmatpush2.msra.mxu0 0.0
        %1125 = vmatprep.subr.mxu0 0.0
        %1126 = vmatpush2.msra.mxu0 0.0
        %1127 = vmatprep.subr.mxu0 0.0
        %1128 = vmatpush2.msra.mxu0 0.0
        %1129 = vmatprep.subr.mxu0 0.0
        %1130 = vmatpush2.msra.mxu0 0.0
        %1131 = vmatprep.subr.mxu0 0.0
        %1132 = vmatpush2.msra.mxu0 0.0
        %1133 = vmatprep.subr.mxu0 0.0
        %1134 = vmatpush2.msra.mxu0 0.0
        %1135 = vmatprep.subr.mxu0 0.0
        %1136 = vmatpush2.msra.mxu0 0.0
        %1137 = vmatprep.subr.mxu0 0.0
        %1138 = vmatpush2.msra.mxu0 0.0
        %1139 = vmatprep.subr.mxu0 0.0
        %1140 = vmatpush2.msra.mxu0 0.0
        %1141 = vmatprep.mubr.f32.mxu0 0.0
        %1142 = vmatmul.mubr.f32.gmra.mxu0 %v1075
        %v1143 = vpop.f32.mrf.mxu0
        %v1144 = vadd.f32 %v236, %v1143
        %v1145 = vpop.f32.mrf.mxu0
        %1146 = vdwg.mxu0
        %v1147 = vmax.f32 %v1144, 0.0
        %v1148 = vadd.f32 %v1147, %v845
        %1149 = vst.msk [vmem:[%s215] sm:$0xff] %vm238, %v1148
        %s1150 = sand.u32 %s137, 1
        %s1151 = scalar_lea.sflag [#allocation3], %s1150
        %s1152 = sand.u32 %s137, 1
        %s1153 = smul.addr %s1152, 8
        %s1154 = scalar_lea.vmem [#allocation2], %s1153
        // Predicated region
        $region41: #{tpu_custom_call.1} parent=39 // pred_check
          %p1155 = pneg %p147
        $region42: #{tpu_custom_call.1} parent=39 // pred_check_branch
          %1157 = sbr.rel (%p1155) target = $region44
        $region43: #{tpu_custom_call.1} parent=39 // pred_region
          %s1159 = ssub.s32 128, 128
          %1160 = vsyncadd %s1151, %s1159
          %s1161 = smul.addr %s19, 128
          %s1162 = scalar_lea.hbm %s5, %s1161
          %s1164 = sshll.u32 %s1154, 4
          %s1165 = int_to_ptr.vmem [resolvable:$true] %s1164
          %1167 = dma.vmem_to_hbm [thread:$0]  %s1165, 128, %s1162, %s1151
        $region44: #{tpu_custom_call.1} parent=39 // pred_fallthru
          _
      $region40: #{tpu_custom_call.1} parent=5 // pred_fallthru
        _
      %p1168 = scmp.le.s32.totalorder 2, %s14
      // Predicated region
      $region45: #{tpu_custom_call.1} parent=5 // pred_check
        %p1169 = pneg %p1168
      $region46: #{tpu_custom_call.1} parent=5 // pred_check_branch
        %1171 = sbr.rel (%p1169) target = $region48
      $region47: #{tpu_custom_call.1} parent=5 // pred_region
        %s1172 = ssub.s32 %s14, 2
        // Predicated region
        $region49: #{tpu_custom_call.1} parent=47 // pred_check
          %p1173 = pneg %p153
        $region50: #{tpu_custom_call.1} parent=47 // pred_check_branch
          %1175 = sbr.rel (%p1173) target = $region52
        $region51: #{tpu_custom_call.1} parent=47 // pred_region
          %s1176 = sand.u32 %s138, 1
          %s1177 = scalar_lea.sflag [#allocation3], %s1176
          %s1178 = sand.u32 %s138, 1
          %s1179 = smul.addr %s1178, 8
          %s1180 = scalar_lea.vmem [#allocation2], %s1179
          %1181 = dma.done %s1177, 128
        $region52: #{tpu_custom_call.1} parent=47 // pred_fallthru
          _
      $region48: #{tpu_custom_call.1} parent=5 // pred_fallthru
        _
    $region6: #{tpu_custom_call.1} parent=1 // loop_footer
      %s18 = sadd.s32 1, %s14
    $region7: #{tpu_custom_call.1} parent=1 // loop_footer_branch
      %13 = sbr.rel target = $region3
    $region8: #{tpu_custom_call.1} parent=1 // loop_exit
      _
    %1182 = vsyncpa [#allocation3], 1
    %s1183 = scalar_lea.sflag [#allocation3], 1
    %1184 = vsyncpa %s1183, 1

</llo_original>
